<compile_context>
chip_gen: v6e
topology: v6e:2x2x1
jax: 0.10.0
libtpu: 0.0.40
codegen_flags: <defaults>
</compile_context>

<pallas_src>
import math

import jax
import jax.numpy as jnp
from jax.experimental import pallas as pl
from jax.experimental.pallas import tpu as pltpu

_NUM_STATS = 6


def _round_up(x, m):
    return ((x + m - 1) // m) * m


# ----------------------------------------------------------------------------
# Pallas kernel: accumulate per-row statistics over one (R, tile_n) tile.
#
# out (R, 6):
#   0: intersection      sum( (x >= 0) * p * (t > 0.5) )
#   1: union             sum( binz + tbin - binz*tbin )
#   2: dice denominator  sum( sigmoid(x)*p + t )
#   3: dice numerator/2  sum( sigmoid(x)*p * t )
#   4: masked BCE        sum( bce_with_logits(x, t) * p )
#   5: valid count       sum( p )
# ----------------------------------------------------------------------------
def _mask_stats_kernel(x_ref, t_ref, v_ref, out_ref):
    @pl.when(pl.program_id(1) == 0)
    def _():
        out_ref[...] = jnp.zeros_like(out_ref)

    x = x_ref[...].astype(jnp.float32)  # logits
    t = t_ref[...].astype(jnp.float32)  # 0/1 targets
    p = v_ref[...].astype(jnp.float32)  # 0/1 valid (non-padding) mask

    # Shared transcendental: e = exp(-|x|) feeds both sigmoid and stable BCE.
    e = jnp.exp(-jnp.abs(x))
    sig = jnp.where(x >= 0.0, 1.0, e) * pl.reciprocal(1.0 + e, approx=True) * p
    # sigmoid(x)*p >= 0.5  <=>  (x >= 0) and p == 1   (p is exactly {0,1})
    binz = jnp.where(x >= 0.0, p, 0.0)
    tbin = (t > 0.5).astype(jnp.float32)
    bce = (jnp.maximum(x, 0.0) - x * t + jnp.log1p(e)) * p

    inter = binz * tbin
    stats = jnp.stack(
        [
            inter.sum(-1),
            (binz + tbin - inter).sum(-1),
            (sig + t).sum(-1),
            (sig * t).sum(-1),
            bce.sum(-1),
            p.sum(-1),
        ],
        axis=-1,
    )  # (R, 6)
    out_ref[...] += stats


def mask_row_stats(pred_masks, tgt_masks, batch_mask, *, max_tile_n=8192):
    """Per-row reductions for the Criterion losses.

    pred_masks : (B, N) float logits
    tgt_masks  : (B, N) 0/1 targets (any float/int dtype; cast in-kernel)
    batch_mask : (B, N) bool, True = padding

    Returns (B, 6) float32 stats (see _mask_stats_kernel docstring).
    """
    B, N = pred_masks.shape
    assert tgt_masks.shape == (B, N) and batch_mask.shape == (B, N)

    # 1 byte/elem pad mask instead of a materialized (B, N) f32 array.
    valid = jnp.logical_not(batch_mask).astype(jnp.int8)

    # Fill all 8 f32 sublanes per vreg: split each row into r sub-rows.
    r = 8 // math.gcd(B, 8)
    R = B * r
    M_needed = _round_up(-(-N // r), 128)  # per-sub-row width, lane aligned

    # VMEM budget (generation aware) -> biggest lane tile whose double-buffered
    # input blocks stay resident.
    try:
        vmem_cap = int(pltpu.get_tpu_info().vmem_capacity_bytes)
    except Exception:  # pragma: no cover - conservative fallback
        vmem_cap = 64 * 1024 * 1024
    vmem_limit = min(vmem_cap // 2, 64 * 1024 * 1024)

    bytes_per_col = 2 * R * (
        jnp.dtype(pred_masks.dtype).itemsize
        + jnp.dtype(tgt_masks.dtype).itemsize
        + 1  # int8 valid mask
    )
    cap = (int(vmem_limit * 0.7) // max(bytes_per_col, 1)) // 128 * 128
    tile_n = max(128, min(max_tile_n, cap, M_needed))

    # Megacore (v7x): split the column tiles across 2 "parallel" grid slots
    # when there is more than one tile; harmless serial loop on 1-TC chips.
    n_tiles = -(-M_needed // tile_n)
    P = 2 if n_tiles >= 2 else 1
    M = _round_up(M_needed, P * tile_n)
    kpp = M // (P * tile_n)
    N_pad = r * M

    # Padding with zeros is exact: padded positions have p = 0 and t = 0, so
    # every accumulated statistic gets a 0 contribution there.
    def prep(a):
        if N_pad != N:
            a = jnp.pad(a, ((0, 0), (0, N_pad - N)))
        return a.reshape(R, M)

    x = prep(pred_masks)
    t = prep(tgt_masks)
    v = prep(valid)

    est = bytes_per_col * tile_n + P * R * _NUM_STATS * 4 + (2 << 20)
    vmem_limit = max(vmem_limit, est)

    col_map = lambda pi, ki: (0, pi * kpp + ki)

    out = pl.pallas_call(
        _mask_stats_kernel,
        out_shape=jax.ShapeDtypeStruct((P, R, _NUM_STATS), jnp.float32),
        grid_spec=pltpu.PrefetchScalarGridSpec(
            num_scalar_prefetch=0,
            grid=(P, kpp),
            in_specs=[
                pl.BlockSpec((R, tile_n), col_map),
                pl.BlockSpec((R, tile_n), col_map),
                pl.BlockSpec((R, tile_n), col_map),
            ],
            out_specs=pl.BlockSpec((None, R, _NUM_STATS), lambda pi, ki: (pi, 0, 0)),
        ),
        compiler_params=pltpu.CompilerParams(
            dimension_semantics=("parallel", "arbitrary"),
            vmem_limit_bytes=int(vmem_limit),
        ),
    )(x, t, v)

    # Fold the megacore split and the sub-row split back into per-row sums.
    return out.sum(axis=0).reshape(B, r, _NUM_STATS).sum(axis=1)


# ----------------------------------------------------------------------------
# Criterion (forward only; the example pred has no aux_outputs).
# ----------------------------------------------------------------------------
class Criterion:
    def __init__(self, loss_weight=(1.0, 1.0, 0.5, 0.5)):
        self.loss_weight = jnp.asarray(loss_weight, dtype=jnp.float32)

    def __call__(self, pred, tgt_padding, gt_centers):
        """
        pred: dict with
          'scores'     : (B,)   predicted IoU scores
          'masks'      : (B, N) mask logits
          'batch_mask' : (B, N) bool, True = padding
          'ref_center' : (B, 3) predicted centers
        tgt_padding : (B, N) 0/1 targets (pad_sequence of gt_spmasks)
        gt_centers  : (B, 3) float32, entries <= -999 are "no supervision"
        """
        pred_scores = jnp.asarray(pred["scores"], jnp.float32).reshape(-1)
        pred_center = jnp.asarray(pred["ref_center"], jnp.float32).reshape(-1, 3)
        gt_centers = jnp.asarray(gt_centers, jnp.float32)

        # --- hot path: per-row mask reductions in the Pallas kernel ---
        stats = mask_row_stats(pred["masks"], tgt_padding, pred["batch_mask"])
        inter = stats[:, 0]
        union = stats[:, 1]
        dice_den = stats[:, 2]
        dice_num = stats[:, 3]
        bce_sum = stats[:, 4]
        pad_sum = stats[:, 5]

        # --- get_iou (no_grad in torch; pure value here) ---
        tgt_scores = inter / (union + 1e-6)

        # --- score loss: masked MSE over rows where IoU > 0.5, else 0 ---
        score_mask = (tgt_scores > 0.5).astype(jnp.float32)
        mse = (pred_scores - tgt_scores) ** 2
        n_sel = score_mask.sum()
        score_loss = jnp.where(
            n_sel > 0, (mse * score_mask).sum() / jnp.maximum(n_sel, 1.0), 0.0
        )

        # --- mask BCE loss: per-row masked mean, then batch mean.
        # (guarded: a fully padded row contributes 0 instead of NaN) ---
        mask_bce_loss = (bce_sum / jnp.maximum(pad_sum, 1.0)).mean()

        # --- dice loss ---
        mask_dice_loss = (1.0 - (2.0 * dice_num + 1.0) / (dice_den + 1.0)).mean()

        # --- center loss: L1 over valid gt entries (gt > -999) ---
        c_mask = (gt_centers > -999.0).astype(jnp.float32)
        l1 = jnp.abs(gt_centers - pred_center)
        center_loss = (l1 * c_mask).sum() / jnp.maximum(c_mask.sum(), 1.0)

        w = self.loss_weight
        loss = (
            w[0] * mask_bce_loss
            + w[1] * mask_dice_loss
            + w[2] * score_loss
            + w[3] * center_loss
        )
        loss_out = {
            "score_loss": score_loss,
            "mask_bce_loss": mask_bce_loss,
            "mask_dice_loss": mask_dice_loss,
            "center_loss": center_loss,
            "loss": loss,
        }
        # TODO(synk): aux_outputs layer losses: stack the L layers on a leading
        # axis and run ONE batched mask_row_stats call (extra grid axis) rather
        # than one pallas_call per layer; omitted here (pred has no aux_outputs).
        return loss, loss_out


if __name__ == "__main__":
    key = jax.random.PRNGKey(0)
    B, N = 4, 300  # batch of 4 queries, padded superpoint length 300

    k1, k2, k3, k4, k5, k6 = jax.random.split(key, 6)

    # per-row valid lengths (simulate pad_sequence / batch_mask)
    lengths = jnp.array([300, 240, 150, 60], dtype=jnp.int32)
    col = jnp.arange(N)[None, :]
    valid = col < lengths[:, None]            # (B, N) bool, True = valid
    batch_mask = jnp.logical_not(valid)       # True = padding

    pred_masks = jax.random.normal(k1, (B, N), dtype=jnp.float32) * 2.0
    # binary gt masks, zero in the padded region (pad_sequence pads with 0)
    gt = (jax.random.uniform(k2, (B, N)) > 0.5).astype(jnp.float32) * valid

    pred_scores = jax.random.uniform(k3, (B,), dtype=jnp.float32)
    pred_center = jax.random.normal(k4, (B, 3), dtype=jnp.float32)
    gt_centers = jax.random.normal(k5, (B, 3), dtype=jnp.float32)
    # mark some gt center entries as "missing"
    miss = jax.random.uniform(k6, (B, 3)) < 0.2
    gt_centers = jnp.where(miss, -1000.0, gt_centers)

    pred = {
        "scores": pred_scores,
        "masks": pred_masks,
        "batch_mask": batch_mask,
        "ref_center": pred_center,
    }

    criterion = Criterion(loss_weight=[1.0, 1.0, 0.5, 0.5])
    loss, loss_out = jax.jit(criterion.__call__)(pred, gt, gt_centers)
    jax.block_until_ready(loss)
    for v in loss_out.values():
        jax.block_until_ready(v)
    print("KERNEL_OK")
</pallas_src>

<mosaic_0001>
module attributes {stable_mosaic.version = 11 : i64} {
  func.func @_mask_stats_kernel(%arg0: i32, %arg1: i32, %arg2: memref<8x256xf32, #tpu.memory_space<vmem>>, %arg3: memref<8x256xf32, #tpu.memory_space<vmem>>, %arg4: memref<8x256xi8, #tpu.memory_space<vmem>>, %arg5: memref<1x8x6xf32, #tpu.memory_space<vmem>>) attributes {dimension_semantics = [#tpu.dimension_semantics<parallel>, #tpu.dimension_semantics<arbitrary>], iteration_bounds = array<i64: 1, 1>, scalar_prefetch = 0 : i64, scratch_operands = 0 : i64, tpu.core_type = #tpu.core_type<tc>, window_params = [{transform_indices = @transform_0, window_bounds = array<i64: 8, 256>}, {transform_indices = @transform_1, window_bounds = array<i64: 8, 256>}, {transform_indices = @transform_2, window_bounds = array<i64: 8, 256>}, {transform_indices = @transform_3, window_bounds = array<i64: 1, 8, 6>}]} {
    %c0_i32 = arith.constant 0 : i32
    %0 = arith.cmpi eq, %arg1, %c0_i32 : i32
    %1 = arith.extui %0 : i1 to i32
    %c0_i32_0 = arith.constant 0 : i32
    %2 = arith.cmpi ne, %1, %c0_i32_0 : i32
    scf.if %2 {
      %cst_25 = arith.constant 0.000000e+00 : f32
      %59 = vector.broadcast %cst_25 : f32 to vector<8x6xf32>
      %c0_26 = arith.constant 0 : index
      %c0_27 = arith.constant 0 : index
      %c0_28 = arith.constant 0 : index
      %60 = vector.load %arg5[%c0_26, %c0_27, %c0_28] : memref<1x8x6xf32, #tpu.memory_space<vmem>>, vector<1x8x6xf32>
      %61 = vector.shape_cast %60 : vector<1x8x6xf32> to vector<8x6xf32>
      %62 = vector.shape_cast %59 : vector<8x6xf32> to vector<1x8x6xf32>
      tpu.vector_store %arg5[%c0_26, %c0_27, %c0_28], %62 {strides = array<i32>} : memref<1x8x6xf32, #tpu.memory_space<vmem>>, vector<1x8x6xf32>,
    } else {
    }
    %c0 = arith.constant 0 : index
    %c0_1 = arith.constant 0 : index
    %3 = vector.load %arg2[%c0, %c0_1] : memref<8x256xf32, #tpu.memory_space<vmem>>, vector<8x256xf32>
    %c0_2 = arith.constant 0 : index
    %c0_3 = arith.constant 0 : index
    %4 = vector.load %arg3[%c0_2, %c0_3] : memref<8x256xf32, #tpu.memory_space<vmem>>, vector<8x256xf32>
    %c0_4 = arith.constant 0 : index
    %c0_5 = arith.constant 0 : index
    %5 = vector.load %arg4[%c0_4, %c0_5] : memref<8x256xi8, #tpu.memory_space<vmem>>, vector<8x256xi8>
    %6 = arith.sitofp %5 : vector<8x256xi8> to vector<8x256xf32>
    %7 = math.absf %3 : vector<8x256xf32>
    %cst = arith.constant 0.000000e+00 : f32
    %8 = vector.broadcast %cst : f32 to vector<8x256xf32>
    %9 = arith.subf %8, %7 : vector<8x256xf32>
    %10 = math.exp %9 : vector<8x256xf32>
    %cst_6 = arith.constant 0.000000e+00 : f32
    %11 = vector.broadcast %cst_6 : f32 to vector<8x256xf32>
    %12 = arith.cmpf oge, %3, %11 : vector<8x256xf32>
    %cst_7 = arith.constant 1.000000e+00 : f32
    %13 = vector.broadcast %cst_7 : f32 to vector<8x256xf32>
    %14 = arith.select %12, %13, %10 : vector<8x256xi1>, vector<8x256xf32>
    %cst_8 = arith.constant 1.000000e+00 : f32
    %15 = vector.broadcast %cst_8 : f32 to vector<8x256xf32>
    %16 = arith.addf %15, %10 : vector<8x256xf32>
    %17 = tpu.reciprocal %16 {approx = true} : vector<8x256xf32> -> vector<8x256xf32>
    %18 = arith.mulf %14, %17 : vector<8x256xf32>
    %19 = arith.mulf %18, %6 : vector<8x256xf32>
    %cst_9 = arith.constant 0.000000e+00 : f32
    %20 = vector.broadcast %cst_9 : f32 to vector<8x256xf32>
    %21 = arith.cmpf oge, %3, %20 : vector<8x256xf32>
    %cst_10 = arith.constant 0.000000e+00 : f32
    %22 = vector.broadcast %cst_10 : f32 to vector<8x256xf32>
    %23 = arith.select %21, %6, %22 : vector<8x256xi1>, vector<8x256xf32>
    %cst_11 = arith.constant 5.000000e-01 : f32
    %24 = vector.broadcast %cst_11 : f32 to vector<8x256xf32>
    %25 = arith.cmpf ogt, %4, %24 : vector<8x256xf32>
    %26 = arith.extui %25 : vector<8x256xi1> to vector<8x256xi32>
    %27 = arith.sitofp %26 : vector<8x256xi32> to vector<8x256xf32>
    %cst_12 = arith.constant 0.000000e+00 : f32
    %28 = vector.broadcast %cst_12 : f32 to vector<8x256xf32>
    %29 = arith.maximumf %3, %28 : vector<8x256xf32>
    %30 = arith.mulf %3, %4 : vector<8x256xf32>
    %31 = arith.subf %29, %30 : vector<8x256xf32>
    %32 = math.log1p %10 : vector<8x256xf32>
    %33 = arith.addf %31, %32 : vector<8x256xf32>
    %34 = arith.mulf %33, %6 : vector<8x256xf32>
    %35 = arith.mulf %23, %27 : vector<8x256xf32>
    %cst_13 = arith.constant dense<0.000000e+00> : vector<8xf32>
    %36 = vector.multi_reduction <add>, %35, %cst_13 [1] : vector<8x256xf32> to vector<8xf32>
    %37 = arith.addf %23, %27 : vector<8x256xf32>
    %38 = arith.subf %37, %35 : vector<8x256xf32>
    %cst_14 = arith.constant dense<0.000000e+00> : vector<8xf32>
    %39 = vector.multi_reduction <add>, %38, %cst_14 [1] : vector<8x256xf32> to vector<8xf32>
    %40 = arith.addf %19, %4 : vector<8x256xf32>
    %cst_15 = arith.constant dense<0.000000e+00> : vector<8xf32>
    %41 = vector.multi_reduction <add>, %40, %cst_15 [1] : vector<8x256xf32> to vector<8xf32>
    %42 = arith.mulf %19, %4 : vector<8x256xf32>
    %cst_16 = arith.constant dense<0.000000e+00> : vector<8xf32>
    %43 = vector.multi_reduction <add>, %42, %cst_16 [1] : vector<8x256xf32> to vector<8xf32>
    %cst_17 = arith.constant dense<0.000000e+00> : vector<8xf32>
    %44 = vector.multi_reduction <add>, %34, %cst_17 [1] : vector<8x256xf32> to vector<8xf32>
    %cst_18 = arith.constant dense<0.000000e+00> : vector<8xf32>
    %45 = vector.multi_reduction <add>, %6, %cst_18 [1] : vector<8x256xf32> to vector<8xf32>
    %46 = vector.shape_cast %36 : vector<8xf32> to vector<8x1xf32>
    %47 = vector.shape_cast %39 : vector<8xf32> to vector<8x1xf32>
    %48 = vector.shape_cast %41 : vector<8xf32> to vector<8x1xf32>
    %49 = vector.shape_cast %43 : vector<8xf32> to vector<8x1xf32>
    %50 = vector.shape_cast %44 : vector<8xf32> to vector<8x1xf32>
    %51 = vector.shape_cast %45 : vector<8xf32> to vector<8x1xf32>
    %52 = tpu.concatenate %46, %47, %48, %49, %50, %51 in 1 : vector<8x1xf32>, vector<8x1xf32>, vector<8x1xf32>, vector<8x1xf32>, vector<8x1xf32>, vector<8x1xf32> -> vector<8x6xf32>
    %c0_19 = arith.constant 0 : index
    %c0_20 = arith.constant 0 : index
    %c0_21 = arith.constant 0 : index
    %53 = vector.load %arg5[%c0_19, %c0_20, %c0_21] : memref<1x8x6xf32, #tpu.memory_space<vmem>>, vector<1x8x6xf32>
    %54 = vector.shape_cast %53 : vector<1x8x6xf32> to vector<8x6xf32>
    %55 = arith.addf %54, %52 : vector<8x6xf32>
    %c0_22 = arith.constant 0 : index
    %c0_23 = arith.constant 0 : index
    %c0_24 = arith.constant 0 : index
    %56 = vector.load %arg5[%c0_22, %c0_23, %c0_24] : memref<1x8x6xf32, #tpu.memory_space<vmem>>, vector<1x8x6xf32>
    %57 = vector.shape_cast %56 : vector<1x8x6xf32> to vector<8x6xf32>
    %58 = vector.shape_cast %55 : vector<8x6xf32> to vector<1x8x6xf32>
    tpu.vector_store %arg5[%c0_22, %c0_23, %c0_24], %58 {strides = array<i32>} : memref<1x8x6xf32, #tpu.memory_space<vmem>>, vector<1x8x6xf32>,
    return
  }
  func.func @transform_0(%arg0: i32, %arg1: i32) -> (i32, i32) {
    %c1_i32 = arith.constant 1 : i32
    %0 = arith.muli %arg0, %c1_i32 : i32
    %1 = arith.addi %0, %arg1 : i32
    %c0_i32 = arith.constant 0 : i32
    %c0_i32_0 = arith.constant 0 : i32
    return %c0_i32, %1 : i32, i32
  }
  func.func @transform_1(%arg0: i32, %arg1: i32) -> (i32, i32) {
    %c1_i32 = arith.constant 1 : i32
    %0 = arith.muli %arg0, %c1_i32 : i32
    %1 = arith.addi %0, %arg1 : i32
    %c0_i32 = arith.constant 0 : i32
    %c0_i32_0 = arith.constant 0 : i32
    return %c0_i32, %1 : i32, i32
  }
  func.func @transform_2(%arg0: i32, %arg1: i32) -> (i32, i32) {
    %c1_i32 = arith.constant 1 : i32
    %0 = arith.muli %arg0, %c1_i32 : i32
    %1 = arith.addi %0, %arg1 : i32
    %c0_i32 = arith.constant 0 : i32
    %c0_i32_0 = arith.constant 0 : i32
    return %c0_i32, %1 : i32, i32
  }
  func.func @transform_3(%arg0: i32, %arg1: i32) -> (i32, i32, i32) {
    %c0_i32 = arith.constant 0 : i32
    %c0_i32_0 = arith.constant 0 : i32
    %c0_i32_1 = arith.constant 0 : i32
    return %arg0, %c0_i32, %c0_i32_0 : i32, i32, i32
  }
}

</mosaic_0001>

<llo_original>
// kernel: a_call__.1
$region0: #{a_call__.1}
  #allocation0 [shape = 'u32[]', space=smem, size = 0x4, offset = 0x4, fixed_abs, tag = 'smem constant byte address 0x4 - core index']
  #allocation1 [shape = 'u32[144,128]{1,0:T(1,128)}', space=vmem, size = 0x12000, scoped, tag = 'internal scratch']
  %s0 = inlined_call_operand.vmem [shape: f32[8,256], index: 0, kind: input, shape index: {}]
  %s1 = inlined_call_operand.vmem [shape: f32[8,256], index: 1, kind: input, shape index: {}]
  %s2 = inlined_call_operand.vmem [shape: s8[8,256], index: 2, kind: input, shape index: {}]
  %s3 = inlined_call_operand.vmem [shape: f32[1,8,6], index: 3, kind: output, shape index: {}]
  %s4 = sld [smem:[#allocation0]]
  $region26: #{a_call__.1} parent=0
    _
  %s6 = ssub.s32 1, %s4
  %s7 = scalar_select 0, %s6, %s4
  // Predicated region
  $region2: #{a_call__.1} parent=0 // pred_check
    _
  $region3: #{a_call__.1} parent=0 // pred_check_branch
    %9 = sbr.rel (0) target = $region5
  $region4: #{a_call__.1} parent=0 // pred_region
    %s10 = sadd.s32 0, 0
    %s11 = smul.u32 2, %s10
    %p12 = scmp.lt.s32.totalorder %s11, 1
    %s13 = scalar_select %p12, %s11, 1
    %s14 = smul.addr %s13, 8
    %s15 = scalar_lea.vmem %s0, %s14
    %s16 = sadd.s32 0, 0
    %s17 = smul.u32 2, %s16
  $region5: #{a_call__.1} parent=0 // pred_fallthru
    _
  // Predicated region
  $region6: #{a_call__.1} parent=0 // pred_check
    _
  $region7: #{a_call__.1} parent=0 // pred_check_branch
    %19 = sbr.rel (0) target = $region9
  $region8: #{a_call__.1} parent=0 // pred_region
    %s20 = sadd.s32 0, 0
    %s21 = smul.u32 2, %s20
    %p22 = scmp.lt.s32.totalorder %s21, 1
    %s23 = scalar_select %p22, %s21, 1
    %s24 = smul.addr %s23, 8
    %s25 = scalar_lea.vmem %s1, %s24
    %s26 = sadd.s32 0, 0
    %s27 = smul.u32 2, %s26
  $region9: #{a_call__.1} parent=0 // pred_fallthru
    _
  // Predicated region
  $region10: #{a_call__.1} parent=0 // pred_check
    _
  $region11: #{a_call__.1} parent=0 // pred_check_branch
    %29 = sbr.rel (0) target = $region13
  $region12: #{a_call__.1} parent=0 // pred_region
    %s30 = sadd.s32 0, 0
    %s31 = smul.u32 2, %s30
    %p32 = scmp.lt.s32.totalorder %s31, 1
    %s33 = scalar_select %p32, %s31, 1
    %s34 = smul.addr %s33, 2
    %s35 = scalar_lea.vmem %s2, %s34
    %s36 = sadd.s32 0, 0
    %s37 = smul.u32 2, %s36
  $region13: #{a_call__.1} parent=0 // pred_fallthru
    _
  %s38 = sadd.s32 0, 0
  %s39 = smul.u32 2, %s38
  %p40 = scmp.lt.s32.totalorder %s39, 1
  %s41 = scalar_select %p40, %s39, 1
  %s42 = smul.addr %s41, 8
  %s43 = scalar_lea.vmem %s0, %s42
  %s44 = sadd.s32 0, 0
  %s45 = smul.u32 2, %s44
  %p46 = scmp.lt.s32.totalorder %s45, 1
  %s47 = scalar_select %p46, %s45, 1
  %s48 = smul.addr %s47, 8
  %s49 = scalar_lea.vmem %s1, %s48
  %s50 = sadd.s32 0, 0
  %s51 = smul.u32 2, %s50
  %p52 = scmp.lt.s32.totalorder %s51, 1
  %s53 = scalar_select %p52, %s51, 1
  %s54 = smul.addr %s53, 2
  %s55 = scalar_lea.vmem %s2, %s54
  %s56 = sadd.s32 0, 0
  %s57 = smul.u32 2, %s56
  %p58 = scmp.lt.s32.totalorder %s57, 1
  %s59 = scalar_select %p58, %s57, 1
  %s60 = smul.addr %s59, 8
  %s61 = scalar_lea.vmem %s0, %s60
  %s62 = sadd.s32 0, 0
  %s63 = smul.u32 2, %s62
  %s64 = sadd.s32 0, 0
  %s65 = smul.u32 2, %s64
  %p66 = scmp.lt.s32.totalorder %s65, 1
  %s67 = scalar_select %p66, %s65, 1
  %s68 = smul.addr %s67, 8
  %s69 = scalar_lea.vmem %s1, %s68
  %s70 = sadd.s32 0, 0
  %s71 = smul.u32 2, %s70
  %s72 = sadd.s32 0, 0
  %s73 = smul.u32 2, %s72
  %p74 = scmp.lt.s32.totalorder %s73, 1
  %s75 = scalar_select %p74, %s73, 1
  %s76 = smul.addr %s75, 2
  %s77 = scalar_lea.vmem %s2, %s76
  %s78 = sadd.s32 0, 0
  %s79 = smul.u32 2, %s78
  %p80 = scmp.eq.s32.totalorder 0, 0
  // Predicated region
  $region14: #{a_call__.1} parent=0 // pred_check
    %p81 = pneg %p80
  $region15: #{a_call__.1} parent=0 // pred_check_branch
    %83 = sbr.rel (%p81) target = $region17
  $region16: #{a_call__.1} parent=0 // pred_region
    %vm84 = vcmask 48128
    %85 = vst.msk [vmem:[%s3] sm:$0xff] %vm84, 0.0
  $region17: #{a_call__.1} parent=0 // pred_fallthru
    _
  %v86 = vld [vmem:[%s61] sm:$0xff]
  %v87 = vld [vmem:[%s61 + $0x8] sm:$0xff]
  %v88 = vld [vmem:[%s69] sm:$0xff]
  %v89 = vld [vmem:[%s69 + $0x8] sm:$0xff]
  %v90 = vld [vmem:[%s77] sm:$0xf]
  %v91 = vunpack.c.0.s8 %v90
  %v92 = vunpack.c.1.s8 %v90
  %v93 = vcvt.s32.f32 %v91
  %v94 = vcvt.s32.f32 %v92
  %v95 = vand.u32 2147483647, %v86
  %v96 = vand.u32 2147483647, %v87
  %v97 = vsub.f32 0.0, %v95
  %v98 = vsub.f32 0.0, %v96
  %v99 = vmul.f32 %v97, 1.442695
  %v100 = vpow.pop %v99
  %v101 = vmul.f32 %v98, 1.442695
  %v102 = vpow.pop %v101
  %vm103 = vcmp.ge.f32.partialorder %v86, 0.0
  %vm104 = vcmp.ge.f32.partialorder %v87, 0.0
  %v105 = vsel %vm103, 1.0, %v100
  %v106 = vsel %vm104, 1.0, %v102
  %v107 = vadd.f32 %v100, 1.0
  %v108 = vadd.f32 %v102, 1.0
  %v109 = vrcp.pop %v107
  %v110 = vrcp.pop %v108
  %v111 = vmul.f32 %v105, %v109
  %v112 = vmul.f32 %v106, %v110
  %v113 = vmul.f32 %v111, %v93
  %v114 = vmul.f32 %v112, %v94
  %v115 = vsel %vm103, %v93, 0.0
  %v116 = vsel %vm104, %v94, 0.0
  %vm117 = vcmp.gt.f32.partialorder %v88, 0.5
  %vm118 = vcmp.gt.f32.partialorder %v89, 0.5
  %v119 = vsel %vm117, 1, 0
  %v120 = vsel %vm118, 1, 0
  %v121 = vcvt.s32.f32 %v119
  %v122 = vcvt.s32.f32 %v120
  %v123 = vmax.f32 %v86, 0.0
  %v124 = vmax.f32 %v87, 0.0
  %v125 = vmul.f32 %v86, %v88
  %v126 = vmul.f32 %v87, %v89
  %v127 = vsub.f32 %v123, %v125
  %v128 = vsub.f32 %v124, %v126
  %v129 = vadd.f32 %v100, 1.0
  %v130 = vlog2.pop %v129
  %v131 = vmul.f32 %v130, 0.6931472
  %v132 = vmul.f32 -0.5, %v100
  %v133 = vadd.f32 %v132, 1.0
  %v134 = vmul.f32 %v133, %v100
  %v135 = vand.u32 2147483647, %v100
  %vm136 = vcmp.lt.f32.partialorder %v135, 0.0004427343
  %v137 = vsel %vm136, %v134, %v131
  %v138 = vadd.f32 %v102, 1.0
  %v139 = vlog2.pop %v138
  %v140 = vmul.f32 %v139, 0.6931472
  %v141 = vmul.f32 -0.5, %v102
  %v142 = vadd.f32 %v141, 1.0
  %v143 = vmul.f32 %v142, %v102
  %v144 = vand.u32 2147483647, %v102
  %vm145 = vcmp.lt.f32.partialorder %v144, 0.0004427343
  %v146 = vsel %vm145, %v143, %v140
  %v147 = vadd.f32 %v127, %v137
  %v148 = vadd.f32 %v128, %v146
  %v149 = vmul.f32 %v147, %v93
  %v150 = vmul.f32 %v148, %v94
  %v151 = vmul.f32 %v115, %v121
  %v152 = vmul.f32 %v116, %v122
  %v153 = vadd.f32 %v151, %v152
  %154 = vadd.xlane.f32.xlu0 %v153
  %v155 = vpop.xlane.xlu0 %154
  %v156 = vadd.f32 %v115, %v121
  %v157 = vadd.f32 %v116, %v122
  %v158 = vsub.f32 %v156, %v151
  %v159 = vsub.f32 %v157, %v152
  %v160 = vadd.f32 %v158, %v159
  %161 = vadd.xlane.f32.xlu0 %v160
  %v162 = vpop.xlane.xlu0 %161
  %v163 = vadd.f32 %v113, %v88
  %v164 = vadd.f32 %v114, %v89
  %v165 = vadd.f32 %v163, %v164
  %166 = vadd.xlane.f32.xlu0 %v165
  %v167 = vpop.xlane.xlu0 %166
  %v168 = vmul.f32 %v113, %v88
  %v169 = vmul.f32 %v114, %v89
  %v170 = vadd.f32 %v168, %v169
  %171 = vadd.xlane.f32.xlu0 %v170
  %v172 = vpop.xlane.xlu0 %171
  %v173 = vadd.f32 %v149, %v150
  %174 = vadd.xlane.f32.xlu0 %v173
  %v175 = vpop.xlane.xlu0 %174
  %v176 = vadd.f32 %v93, %v94
  %177 = vadd.xlane.f32.xlu0 %v176
  %v178 = vpop.xlane.xlu0 %177
  %vm179 = vcmask 7168
  %v180 = vsel %vm179, %v155, %v162
  %vm181 = vcmask 15360
  %v182 = vsel %vm181, %v180, %v167
  %vm183 = vcmask 23552
  %v184 = vsel %vm183, %v182, %v172
  %vm185 = vcmask 31744
  %v186 = vsel %vm185, %v184, %v175
  %vm187 = vcmask 39936
  %v188 = vsel %vm187, %v186, %v178
  %v189 = vld [vmem:[%s3] sm:$0xff]
  %v190 = vadd.f32 %v189, %v188
  %vm191 = vcmask 48128
  %192 = vst.msk [vmem:[%s3] sm:$0xff] %vm191, %v190
  // Predicated region
  $region18: #{a_call__.1} parent=0 // pred_check
    _
  $region19: #{a_call__.1} parent=0 // pred_check_branch
    %194 = sbr.rel (0) target = $region21
  $region20: #{a_call__.1} parent=0 // pred_region
    _
  $region21: #{a_call__.1} parent=0 // pred_fallthru
    _
  // Predicated region
  $region22: #{a_call__.1} parent=0 // pred_check
    _
  $region23: #{a_call__.1} parent=0 // pred_check_branch
    %196 = sbr.rel (0) target = $region25
  $region24: #{a_call__.1} parent=0 // pred_region
    _
  $region25: #{a_call__.1} parent=0 // pred_fallthru
    _

</llo_original>
